<compile_context>
chip_gen: v5e
topology: v5e:2x2
jax: 0.10.0
libtpu: 0.0.40
codegen_flags: <defaults>
</compile_context>

<pallas_src>
import math

import jax
import jax.numpy as jnp
from jax import lax
from jax.experimental import pallas as pl
from jax.experimental.pallas import tpu as pltpu


# Fixed-table layout for freq='h': column order matches x_mark columns.
_TABLE_ORDER = ("month", "day", "weekday", "hour")
_TABLE_SIZES = {"month": 13, "day": 32, "weekday": 7, "hour": 24}
_N_TAB = sum(_TABLE_SIZES.values())  # 76


# ----------------------------- Pallas kernel ------------------------------ #
def data_embedding_kernel(xh_ref, m_ref, w_ref, posb_ref, o_ref):
    """Grid = (n_tiles, B): posb block is reused across the inner batch axis.

    xh_ref   : (1, 1, tl+2, c_in)       haloed value rows [start-1 .. start+tl] (circular)
    m_ref    : (1, tl, 4)  int32        time marks, per-column table offsets pre-added
    w_ref    : (3*c_in + 76, d_model)   [flattened conv weight ; fixed sinusoidal tables]
    posb_ref : (tl, d_model)            positional embedding + conv bias (folded)
    o_ref    : (1, tl, d_model)
    """
    tl = o_ref.shape[1]
    c_in = xh_ref.shape[3]
    n_tab = w_ref.shape[0] - 3 * c_in

    # ---- TokenEmbedding: circular kernel-3 Conv1d via pre-stitched halo ----
    xh = xh_ref[0, 0]                       # (tl+2, c_in)
    xp = xh[0:tl, :]                        # rows t-1
    xc = xh[1:tl + 1, :]                    # rows t
    xn = xh[2:tl + 2, :]                    # rows t+1

    # ---- TemporalEmbedding (fixed): multi-hot over the concatenated table ----
    # Per-column offsets make the 4 hit columns disjoint, so OR == sum.
    # (Out-of-range marks silently give a zero embedding; nn.Embedding would error.)
    marks = m_ref[0]                        # (tl, 4) int32
    iota = lax.broadcasted_iota(jnp.int32, (tl, n_tab), 1)
    hit = ((iota == marks[:, 0:1]) | (iota == marks[:, 1:2])
           | (iota == marks[:, 2:3]) | (iota == marks[:, 3:4]))
    multi_hot = hit.astype(jnp.float32)     # single convert

    # ---- ONE fused MXU matmul: [x_{t-1}|x_t|x_{t+1}|multi_hot] @ [W ; table] ----
    lhs = jnp.concatenate([xp, xc, xn, multi_hot], axis=-1)   # (tl, 3*c_in + 76)
    out = jnp.dot(lhs, w_ref[...], preferred_element_type=jnp.float32)

    # ---- + (positional + conv bias); Dropout = identity ----
    o_ref[0] = (out + posb_ref[...]).astype(o_ref.dtype)


def _choose_l_tile(seq_len, max_rows=2048):
    """Largest multiple-of-8 divisor of L that is <= max_rows (else full L)."""
    if seq_len <= max_rows:
        return seq_len
    cap = max_rows - max_rows % 8
    for t in range(cap, 7, -8):
        if seq_len % t == 0:
            return t
    return seq_len


def data_embedding_pallas(x_halo, marks_adj, w_comb, posb, *, l_tile):
    B, n_tiles, tlp2, c_in = x_halo.shape
    assert tlp2 == l_tile + 2
    L = n_tiles * l_tile
    n_k, d_model = w_comb.shape

    return pl.pallas_call(
        data_embedding_kernel,
        out_shape=jax.ShapeDtypeStruct((B, L, d_model), jnp.float32),
        grid_spec=pltpu.PrefetchScalarGridSpec(
            num_scalar_prefetch=0,
            # Outer axis = L-tiles so the posb block index is constant across
            # the inner batch axis (fetched once per tile, reused for all b).
            grid=(n_tiles, B),
            in_specs=[
                pl.BlockSpec((1, 1, tlp2, c_in), lambda j, b: (b, j, 0, 0)),
                pl.BlockSpec((1, l_tile, 4), lambda j, b: (b, j, 0)),
                pl.BlockSpec((n_k, d_model), lambda j, b: (0, 0)),
                pl.BlockSpec((l_tile, d_model), lambda j, b: (j, 0)),
            ],
            out_specs=pl.BlockSpec((1, l_tile, d_model), lambda j, b: (b, j, 0)),
        ),
        compiler_params=pltpu.CompilerParams(
            dimension_semantics=("parallel", "parallel"),
            # Well under the scoped limit on v5e/v6e/v7x even at tl=2048,
            # d_model=512 (double-buffered out + posb + x + marks ≈ a few MiB).
            vmem_limit_bytes=32 * 1024 * 1024,
        ),
    )(x_halo, marks_adj, w_comb, posb)


# ------------------------------- glue (JAX) -------------------------------- #
def sinusoidal_table(n_pos, d_model):
    """Matches PositionalEmbedding / FixedEmbedding table construction."""
    position = jnp.arange(n_pos, dtype=jnp.float32)[:, None]
    div_term = jnp.exp(jnp.arange(0, d_model, 2, dtype=jnp.float32)
                       * (-(math.log(10000.0) / d_model)))
    tab = jnp.zeros((n_pos, d_model), dtype=jnp.float32)
    tab = tab.at[:, 0::2].set(jnp.sin(position * div_term))
    tab = tab.at[:, 1::2].set(jnp.cos(position * div_term))
    return tab


def make_params(key, c_in, d_model):
    k_w, k_b = jax.random.split(key)
    # Conv1d(c_in, d_model, 3) kaiming_normal fan_in, leaky_relu(0.01)
    fan_in = c_in * 3
    gain = math.sqrt(2.0 / (1.0 + 0.01 ** 2))
    std = gain / math.sqrt(fan_in)
    conv_w = std * jax.random.normal(k_w, (d_model, c_in, 3), jnp.float32)
    bound = 1.0 / math.sqrt(fan_in)
    conv_b = jax.random.uniform(k_b, (d_model,), jnp.float32, -bound, bound)
    # Fixed (non-learned) sinusoidal embedding tables, freq='h' (no minute)
    tables = {name: sinusoidal_table(_TABLE_SIZES[name], d_model)
              for name in _TABLE_ORDER}
    return conv_w, conv_b, tables


def data_embedding_forward(x, x_mark, conv_w, conv_b, tables, *, l_tile=None):
    """x: (B, L, c_in) float32; x_mark: (B, L, 4) int32 [month, day, weekday, hour]."""
    B, L, c_in = x.shape
    d_model = conv_w.shape[0]

    if l_tile is None:
        l_tile = _choose_l_tile(L)
    assert L % l_tile == 0, (L, l_tile)
    n_tiles = L // l_tile

    # PyTorch Conv1d is cross-correlation: out[t] = b + sum_k w[:,:,k] x[t-1+k].
    # Flatten so rows match LHS columns [x_{t-1} | x_t | x_{t+1}]:
    #   w_flat[k*c_in + c, o] = conv_w[o, c, k]
    w_flat = jnp.transpose(conv_w, (2, 1, 0)).reshape(3 * c_in, d_model)

    # Combined matmul RHS: [conv weight ; concatenated fixed temporal tables].
    table = jnp.concatenate([tables[name] for name in _TABLE_ORDER], axis=0)
    w_comb = jnp.concatenate([w_flat, table], axis=0)     # (3*c_in + 76, d_model)

    # Marks get per-column offsets into the concatenated table.
    offs, acc = [], 0
    for name in _TABLE_ORDER:
        offs.append(acc)
        acc += tables[name].shape[0]
    marks_adj = x_mark.astype(jnp.int32) + jnp.asarray(offs, jnp.int32)[None, None, :]

    # Positional embedding and conv bias folded into one resident array.
    posb = sinusoidal_table(L, d_model) + conv_b[None, :]

    # Pre-stitched circular halo: rows (start-1 .. start+l_tile) mod L per tile.
    starts = jnp.arange(n_tiles, dtype=jnp.int32) * l_tile
    idx = (starts[:, None] + jnp.arange(-1, l_tile + 1, dtype=jnp.int32)[None, :]) % L
    x_halo = x[:, idx, :]                                   # (B, n_tiles, l_tile+2, c_in)

    out = data_embedding_pallas(x_halo, marks_adj, w_comb, posb, l_tile=l_tile)
    # Dropout(p=0.01) in eval mode = identity.
    return out


if __name__ == "__main__":
    # d_model = 128 keeps the output lane-dense; l_tile = 8 exercises L-tiling.
    B, L, c_in, d_model = 2, 16, 4, 128
    l_tile = 8

    key = jax.random.PRNGKey(0)
    k_x, k_m, k_d, k_w, k_h, k_p = jax.random.split(key, 6)

    x = jax.random.normal(k_x, (B, L, c_in), jnp.float32)
    x_mark = jnp.stack(
        [jax.random.randint(k_m, (B, L), 0, 13),   # month
         jax.random.randint(k_d, (B, L), 0, 32),   # day
         jax.random.randint(k_w, (B, L), 0, 7),    # weekday
         jax.random.randint(k_h, (B, L), 0, 24)],  # hour
        axis=-1).astype(jnp.int32)

    conv_w, conv_b, tables = make_params(k_p, c_in, d_model)

    out = data_embedding_forward(x, x_mark, conv_w, conv_b, tables, l_tile=l_tile)
    out = jax.block_until_ready(out)

    # Pure-JAX reference (mirrors the PyTorch forward in eval mode).
    x_stack = jnp.concatenate(
        [jnp.roll(x, 1, axis=1), x, jnp.roll(x, -1, axis=1)], axis=-1)
    w_flat = jnp.transpose(conv_w, (2, 1, 0)).reshape(3 * c_in, d_model)
    pos_emb = sinusoidal_table(L, d_model)
    temp_emb = (tables["hour"][x_mark[:, :, 3]]
                + tables["weekday"][x_mark[:, :, 2]]
                + tables["day"][x_mark[:, :, 1]]
                + tables["month"][x_mark[:, :, 0]])
    ref = (jnp.einsum("blc,cd->bld", x_stack, w_flat)
           + conv_b[None, None, :] + pos_emb[None] + temp_emb)

    assert out.shape == (B, L, d_model)
    assert jnp.allclose(out, ref, atol=1e-4, rtol=1e-4), (
        float(jnp.max(jnp.abs(out - ref))))

    print("KERNEL_OK")
</pallas_src>

<mosaic_0001>
module attributes {stable_mosaic.version = 11 : i64} {
  func.func @data_embedding_kernel(%arg0: i32, %arg1: i32, %arg2: memref<1x1x10x4xf32, #tpu.memory_space<vmem>>, %arg3: memref<1x8x4xi32, #tpu.memory_space<vmem>>, %arg4: memref<88x128xf32, #tpu.memory_space<vmem>>, %arg5: memref<8x128xf32, #tpu.memory_space<vmem>>, %arg6: memref<1x8x128xf32, #tpu.memory_space<vmem>>) attributes {dimension_semantics = [#tpu.dimension_semantics<parallel>, #tpu.dimension_semantics<parallel>], iteration_bounds = array<i64: 2, 2>, scalar_prefetch = 0 : i64, scratch_operands = 0 : i64, tpu.core_type = #tpu.core_type<tc>, window_params = [{transform_indices = @transform_0, window_bounds = array<i64: 1, 1, 10, 4>}, {transform_indices = @transform_1, window_bounds = array<i64: 1, 8, 4>}, {pipeline_mode = #tpu.pipeline_mode<synchronous>, transform_indices = @transform_2, window_bounds = array<i64: 88, 128>}, {transform_indices = @transform_3, window_bounds = array<i64: 8, 128>}, {transform_indices = @transform_4, window_bounds = array<i64: 1, 8, 128>}]} {
    %c0 = arith.constant 0 : index
    %c0_0 = arith.constant 0 : index
    %c0_1 = arith.constant 0 : index
    %c0_2 = arith.constant 0 : index
    %0 = vector.load %arg2[%c0, %c0_0, %c0_1, %c0_2] : memref<1x1x10x4xf32, #tpu.memory_space<vmem>>, vector<1x1x10x4xf32>
    %1 = vector.shape_cast %0 : vector<1x1x10x4xf32> to vector<10x4xf32>
    %2 = vector.extract_strided_slice %1 {offsets = [0, 0], sizes = [8, 4], strides = [1, 1]} : vector<10x4xf32> to vector<8x4xf32>
    %3 = vector.extract_strided_slice %1 {offsets = [1, 0], sizes = [8, 4], strides = [1, 1]} : vector<10x4xf32> to vector<8x4xf32>
    %4 = vector.extract_strided_slice %1 {offsets = [2, 0], sizes = [8, 4], strides = [1, 1]} : vector<10x4xf32> to vector<8x4xf32>
    %c0_3 = arith.constant 0 : index
    %c0_4 = arith.constant 0 : index
    %c0_5 = arith.constant 0 : index
    %5 = vector.load %arg3[%c0_3, %c0_4, %c0_5] : memref<1x8x4xi32, #tpu.memory_space<vmem>>, vector<1x8x4xi32>
    %6 = vector.shape_cast %5 : vector<1x8x4xi32> to vector<8x4xi32>
    %7 = tpu.iota {dimensions = array<i32: 1>} : vector<8x76xi32>
    %8 = vector.extract_strided_slice %6 {offsets = [0, 0], sizes = [8, 1], strides = [1, 1]} : vector<8x4xi32> to vector<8x1xi32>
    %9 = vector.broadcast %8 : vector<8x1xi32> to vector<8x76xi32>
    %10 = arith.cmpi eq, %7, %9 : vector<8x76xi32>
    %11 = vector.extract_strided_slice %6 {offsets = [0, 1], sizes = [8, 1], strides = [1, 1]} : vector<8x4xi32> to vector<8x1xi32>
    %12 = vector.broadcast %11 : vector<8x1xi32> to vector<8x76xi32>
    %13 = arith.cmpi eq, %7, %12 : vector<8x76xi32>
    %14 = arith.ori %10, %13 : vector<8x76xi1>
    %15 = vector.extract_strided_slice %6 {offsets = [0, 2], sizes = [8, 1], strides = [1, 1]} : vector<8x4xi32> to vector<8x1xi32>
    %16 = vector.broadcast %15 : vector<8x1xi32> to vector<8x76xi32>
    %17 = arith.cmpi eq, %7, %16 : vector<8x76xi32>
    %18 = arith.ori %14, %17 : vector<8x76xi1>
    %19 = vector.extract_strided_slice %6 {offsets = [0, 3], sizes = [8, 1], strides = [1, 1]} : vector<8x4xi32> to vector<8x1xi32>
    %20 = vector.broadcast %19 : vector<8x1xi32> to vector<8x76xi32>
    %21 = arith.cmpi eq, %7, %20 : vector<8x76xi32>
    %22 = arith.ori %18, %21 : vector<8x76xi1>
    %23 = arith.extui %22 : vector<8x76xi1> to vector<8x76xi32>
    %24 = arith.sitofp %23 : vector<8x76xi32> to vector<8x76xf32>
    %25 = tpu.concatenate %2, %3, %4, %24 in 1 : vector<8x4xf32>, vector<8x4xf32>, vector<8x4xf32>, vector<8x76xf32> -> vector<8x88xf32>
    %c0_6 = arith.constant 0 : index
    %c0_7 = arith.constant 0 : index
    %26 = vector.load %arg4[%c0_6, %c0_7] : memref<88x128xf32, #tpu.memory_space<vmem>>, vector<88x128xf32>
    %cst = arith.constant dense<0.000000e+00> : vector<8x128xf32>
    %27 = tpu.matmul %25, %26, %cst {dimension_numbers = #tpu.dot_dimension_numbers<[1], [0], [0], [1], [0, 0, 1, 1], [], []>} : vector<8x88xf32>, vector<88x128xf32>, vector<8x128xf32> -> vector<8x128xf32>
    %c0_8 = arith.constant 0 : index
    %c0_9 = arith.constant 0 : index
    %28 = vector.load %arg5[%c0_8, %c0_9] : memref<8x128xf32, #tpu.memory_space<vmem>>, vector<8x128xf32>
    %29 = arith.addf %27, %28 : vector<8x128xf32>
    %c0_10 = arith.constant 0 : index
    %c0_11 = arith.constant 0 : index
    %c0_12 = arith.constant 0 : index
    %30 = vector.load %arg6[%c0_10, %c0_11, %c0_12] : memref<1x8x128xf32, #tpu.memory_space<vmem>>, vector<1x8x128xf32>
    %31 = vector.shape_cast %30 : vector<1x8x128xf32> to vector<8x128xf32>
    %32 = vector.shape_cast %29 : vector<8x128xf32> to vector<1x8x128xf32>
    tpu.vector_store %arg6[%c0_10, %c0_11, %c0_12], %32 {strides = array<i32>} : memref<1x8x128xf32, #tpu.memory_space<vmem>>, vector<1x8x128xf32>,
    return
  }
  func.func @transform_0(%arg0: i32, %arg1: i32) -> (i32, i32, i32, i32) {
    %c0_i32 = arith.constant 0 : i32
    %c0_i32_0 = arith.constant 0 : i32
    %c0_i32_1 = arith.constant 0 : i32
    return %arg1, %arg0, %c0_i32, %c0_i32_0 : i32, i32, i32, i32
  }
  func.func @transform_1(%arg0: i32, %arg1: i32) -> (i32, i32, i32) {
    %c0_i32 = arith.constant 0 : i32
    %c0_i32_0 = arith.constant 0 : i32
    return %arg1, %arg0, %c0_i32 : i32, i32, i32
  }
  func.func @transform_2(%arg0: i32, %arg1: i32) -> (i32, i32) {
    %c0_i32 = arith.constant 0 : i32
    %c0_i32_0 = arith.constant 0 : i32
    %c0_i32_1 = arith.constant 0 : i32
    return %c0_i32, %c0_i32_0 : i32, i32
  }
  func.func @transform_3(%arg0: i32, %arg1: i32) -> (i32, i32) {
    %c0_i32 = arith.constant 0 : i32
    %c0_i32_0 = arith.constant 0 : i32
    return %arg0, %c0_i32 : i32, i32
  }
  func.func @transform_4(%arg0: i32, %arg1: i32) -> (i32, i32, i32) {
    %c0_i32 = arith.constant 0 : i32
    %c0_i32_0 = arith.constant 0 : i32
    return %arg1, %arg0, %c0_i32 : i32, i32, i32
  }
}

</mosaic_0001>

<llo_original>
// kernel: tpu_custom_call.1
$region0: #{tpu_custom_call.1}
  #allocation0 [shape = 'u32[]', space=smem, size = 0x4, offset = 0x4, fixed_abs, tag = 'smem constant byte address 0x4 - core index']
  #allocation1 [shape = 'u32[72,128]{1,0:T(1,128)}', space=vmem, size = 0x9000, scoped, tag = 'internal scratch']
  %s0 = inlined_call_operand.vmem [shape: f32[2,2,10,4], index: 0, kind: input, shape index: {}]
  %s1 = inlined_call_operand.vmem [shape: s32[2,16,4], index: 1, kind: input, shape index: {}]
  %s2 = inlined_call_operand.vmem [shape: f32[88,128], index: 2, kind: input, shape index: {}]
  %s3 = inlined_call_operand.vmem [shape: f32[16,128], index: 3, kind: input, shape index: {}]
  %s4 = inlined_call_operand.hbm [shape: f32[2,16,128], index: 4, kind: output, shape index: {}]
  %s5 = sld [smem:[#allocation0]]
  $region49: #{tpu_custom_call.1} parent=0
    _
  %s7 = ssub.s32 1, %s5
  %s8 = scalar_select 0, %s7, %s5
  $region1: #{tpu_custom_call.1} parent=0
    #allocation2 [shape = 'u8[8192]{0}', space=vmem, size = 0x2000, scoped, tag = 'output window, operand 0']
    #allocation3 [shape = 's32[2]{0}', space=sflag, size = 0x8, scoped, tag = 'scoped memory for tpu_custom_call.1']
    %9 = vsyncpa [#allocation3], 0
    %s10 = scalar_lea.sflag [#allocation3], 1
    %11 = vsyncpa %s10, 0
    loop: start=0, step=1, limit=6
    $region2: #{tpu_custom_call.1} parent=1 // loop_pre_header
      _
    $region3: #{tpu_custom_call.1} parent=1 // loop_header
      %s13 = sphi 0, %s17
      %p14 = scmp.ge.s32.totalorder %s13, 6
      %s20 = sphi 0, %s32
      %s21 = sphi 0, %s28
      %s22 = sphi 0, %s20
      %s23 = sphi 0, %s21
      %s24 = sphi 0, %s22
      %s25 = sphi 0, %s23
      %s37 = sphi 0, %s39
      %s40 = sphi 0, %s37
      %s41 = sphi 0, %s40
      %s57 = sphi 0, %s41
      %s65 = sphi 0, %s67
      %s68 = sphi 0, %s65
      %s69 = sphi 0, %s68
      %s85 = sphi 0, %s69
      %s89 = sphi 0, %s89
      %s91 = sphi 0, %s89
      %s92 = sphi 0, %s91
      %s106 = sphi 0, %s92
      %s112 = sphi 0, %s114
      %s115 = sphi 0, %s112
      %s116 = sphi 0, %s115
      %s132 = sphi 0, %s116
      %s140 = sphi 0, %s142
      %s143 = sphi 0, %s140
      %s144 = sphi 0, %s143
      %s160 = sphi 0, %s144
    $region4: #{tpu_custom_call.1} parent=1 // loop_header_branch
      %16 = sbr.rel (%p14) target = $region8
    $region5: #{tpu_custom_call.1} parent=1 // loop_body
      %s18 = ssub.s32 %s13, 1
      %s19 = ssub.s32 %s13, 2
      %s26 = sadd.s32 1, %s21
      %p27 = scmp.ge.s32.totalorder %s26, 2
      %s28 = scalar_select %p27, 0, %s26
      %s29 = sadd.s32 1, %s20
      %s30 = scalar_select %p27, %s29, %s20
      %p31 = scmp.ge.s32.totalorder %s30, 2
      %s32 = scalar_select %p31, 0, %s30
      %s33 = ssub.s32 %s21, %s28
      %s34 = ssub.s32 %s20, %s32
      %s35 = sor.u32 %s33, %s34
      %p36 = scmp.eq.s32.totalorder %s35, 0
      %s38 = sadd.s32 %s37, 1
      %s39 = scalar_select %p36, %s37, %s38
      %p42 = pneg %p36
      %p43 = scmp.eq.s32.totalorder %s13, 3
      %p44 = por %p42, %p43
      %p45 = scmp.ne.s32.totalorder %s37, %s40
      %p46 = scmp.eq.s32.totalorder %s13, 0
      %p47 = por %p45, %p46
      %p48 = scmp.ne.s32.totalorder %s37, %s40
      %p49 = scmp.eq.s32.totalorder %s18, 3
      %p50 = por %p48, %p49
      %p51 = scmp.ne.s32.totalorder %s40, %s41
      %p52 = scmp.eq.s32.totalorder %s18, 0
      %p53 = por %p51, %p52
      %p54 = scmp.ne.s32.totalorder %s40, %s41
      %p55 = scmp.eq.s32.totalorder %s19, 3
      %p56 = por %p54, %p55
      %p58 = scmp.ne.s32.totalorder %s41, %s57
      %p59 = scmp.eq.s32.totalorder %s19, 0
      %p60 = por %p58, %p59
      %s61 = ssub.s32 %s21, %s28
      %s62 = ssub.s32 %s20, %s32
      %s63 = sor.u32 %s61, %s62
      %p64 = scmp.eq.s32.totalorder %s63, 0
      %s66 = sadd.s32 %s65, 1
      %s67 = scalar_select %p64, %s65, %s66
      %p70 = pneg %p64
      %p71 = scmp.eq.s32.totalorder %s13, 3
      %p72 = por %p70, %p71
      %p73 = scmp.ne.s32.totalorder %s65, %s68
      %p74 = scmp.eq.s32.totalorder %s13, 0
      %p75 = por %p73, %p74
      %p76 = scmp.ne.s32.totalorder %s65, %s68
      %p77 = scmp.eq.s32.totalorder %s18, 3
      %p78 = por %p76, %p77
      %p79 = scmp.ne.s32.totalorder %s68, %s69
      %p80 = scmp.eq.s32.totalorder %s18, 0
      %p81 = por %p79, %p80
      %p82 = scmp.ne.s32.totalorder %s68, %s69
      %p83 = scmp.eq.s32.totalorder %s19, 3
      %p84 = por %p82, %p83
      %p86 = scmp.ne.s32.totalorder %s69, %s85
      %p87 = scmp.eq.s32.totalorder %s19, 0
      %p88 = por %p86, %p87
      %s90 = sadd.s32 %s89, 1
      %p93 = scmp.eq.s32.totalorder %s13, 3
      %p94 = scmp.ne.s32.totalorder %s89, %s91
      %p95 = scmp.eq.s32.totalorder %s13, 0
      %p96 = por %p94, %p95
      %p97 = scmp.ne.s32.totalorder %s89, %s91
      %p98 = scmp.eq.s32.totalorder %s18, 3
      %p99 = por %p97, %p98
      %p100 = scmp.ne.s32.totalorder %s91, %s92
      %p101 = scmp.eq.s32.totalorder %s18, 0
      %p102 = por %p100, %p101
      %p103 = scmp.ne.s32.totalorder %s91, %s92
      %p104 = scmp.eq.s32.totalorder %s19, 3
      %p105 = por %p103, %p104
      %p107 = scmp.ne.s32.totalorder %s92, %s106
      %p108 = scmp.eq.s32.totalorder %s19, 0
      %p109 = por %p107, %p108
      %s110 = ssub.s32 %s20, %s32
      %p111 = scmp.eq.s32.totalorder %s110, 0
      %s113 = sadd.s32 %s112, 1
      %s114 = scalar_select %p111, %s112, %s113
      %p117 = pneg %p111
      %p118 = scmp.eq.s32.totalorder %s13, 3
      %p119 = por %p117, %p118
      %p120 = scmp.ne.s32.totalorder %s112, %s115
      %p121 = scmp.eq.s32.totalorder %s13, 0
      %p122 = por %p120, %p121
      %p123 = scmp.ne.s32.totalorder %s112, %s115
      %p124 = scmp.eq.s32.totalorder %s18, 3
      %p125 = por %p123, %p124
      %p126 = scmp.ne.s32.totalorder %s115, %s116
      %p127 = scmp.eq.s32.totalorder %s18, 0
      %p128 = por %p126, %p127
      %p129 = scmp.ne.s32.totalorder %s115, %s116
      %p130 = scmp.eq.s32.totalorder %s19, 3
      %p131 = por %p129, %p130
      %p133 = scmp.ne.s32.totalorder %s116, %s132
      %p134 = scmp.eq.s32.totalorder %s19, 0
      %p135 = por %p133, %p134
      %s136 = ssub.s32 %s21, %s28
      %s137 = ssub.s32 %s20, %s32
      %s138 = sor.u32 %s136, %s137
      %p139 = scmp.eq.s32.totalorder %s138, 0
      %s141 = sadd.s32 %s140, 1
      %s142 = scalar_select %p139, %s140, %s141
      %p145 = pneg %p139
      %p146 = scmp.eq.s32.totalorder %s13, 3
      %p147 = por %p145, %p146
      %p148 = scmp.ne.s32.totalorder %s140, %s143
      %p149 = scmp.eq.s32.totalorder %s13, 0
      %p150 = por %p148, %p149
      %p151 = scmp.ne.s32.totalorder %s140, %s143
      %p152 = scmp.eq.s32.totalorder %s18, 3
      %p153 = por %p151, %p152
      %p154 = scmp.ne.s32.totalorder %s143, %s144
      %p155 = scmp.eq.s32.totalorder %s18, 0
      %p156 = por %p154, %p155
      %p157 = scmp.ne.s32.totalorder %s143, %s144
      %p158 = scmp.eq.s32.totalorder %s19, 3
      %p159 = por %p157, %p158
      %p161 = scmp.ne.s32.totalorder %s144, %s160
      %p162 = scmp.eq.s32.totalorder %s19, 0
      %p163 = por %p161, %p162
      %p164 = scmp.le.s32.totalorder 1, %s13
      %p165 = scmp.lt.s32.totalorder %s13, 5
      %p166 = pnand %p164, %p165
      %p167 = pneg %p166
      // Predicated region
      $region9: #{tpu_custom_call.1} parent=5 // pred_check
        _
      $region10: #{tpu_custom_call.1} parent=5 // pred_check_branch
        %169 = sbr.rel (%p166) target = $region12
      $region11: #{tpu_custom_call.1} parent=5 // pred_region
        %s170 = ssub.s32 %s13, 1
        // Predicated region
        $region13: #{tpu_custom_call.1} parent=11 // pred_check
          %p171 = pneg %p102
        $region14: #{tpu_custom_call.1} parent=11 // pred_check_branch
          %173 = sbr.rel (%p171) target = $region16
        $region15: #{tpu_custom_call.1} parent=11 // pred_region
          _
        $region16: #{tpu_custom_call.1} parent=11 // pred_fallthru
          _
      $region12: #{tpu_custom_call.1} parent=5 // pred_fallthru
        _
      %p174 = scmp.lt.s32.totalorder %s13, 4
      // Predicated region
      $region17: #{tpu_custom_call.1} parent=5 // pred_check
        %p175 = pneg %p174
      $region18: #{tpu_custom_call.1} parent=5 // pred_check_branch
        %177 = sbr.rel (%p175) target = $region20
      $region19: #{tpu_custom_call.1} parent=5 // pred_region
        // Predicated region
        $region21: #{tpu_custom_call.1} parent=19 // pred_check
          %p178 = pneg %p47
        $region22: #{tpu_custom_call.1} parent=19 // pred_check_branch
          %180 = sbr.rel (%p178) target = $region24
        $region23: #{tpu_custom_call.1} parent=19 // pred_region
          %p181 = scmp.lt.s32.totalorder %s21, 1
          %s182 = scalar_select %p181, %s21, 1
          %p183 = scmp.lt.s32.totalorder %s20, 1
          %s184 = scalar_select %p183, %s20, 1
          %s185 = smul.addr %s184, 2
          %s186 = smul.addr %s182, 4
          %s187 = sadd.s32 %s185, %s186
          %s188 = smul.addr %s187, 8
          %s189 = scalar_lea.vmem %s0, %s188
        $region24: #{tpu_custom_call.1} parent=19 // pred_fallthru
          _
        // Predicated region
        $region25: #{tpu_custom_call.1} parent=19 // pred_check
          %p190 = pneg %p75
        $region26: #{tpu_custom_call.1} parent=19 // pred_check_branch
          %192 = sbr.rel (%p190) target = $region28
        $region27: #{tpu_custom_call.1} parent=19 // pred_region
          %p193 = scmp.lt.s32.totalorder %s21, 1
          %s194 = scalar_select %p193, %s21, 1
          %p195 = scmp.lt.s32.totalorder %s20, 1
          %s196 = scalar_select %p195, %s20, 1
          %s197 = smul.addr %s194, 2
          %s198 = sadd.s32 %s196, %s197
          %s199 = smul.addr %s198, 8
          %s200 = scalar_lea.vmem %s1, %s199
        $region28: #{tpu_custom_call.1} parent=19 // pred_fallthru
          _
        // Predicated region
        $region29: #{tpu_custom_call.1} parent=19 // pred_check
          %p201 = pneg %p122
        $region30: #{tpu_custom_call.1} parent=19 // pred_check_branch
          %203 = sbr.rel (%p201) target = $region32
        $region31: #{tpu_custom_call.1} parent=19 // pred_region
          %p204 = scmp.lt.s32.totalorder %s20, 1
          %s205 = scalar_select %p204, %s20, 1
          %s206 = smul.addr %s205, 8
          %s207 = scalar_lea.vmem %s3, %s206
        $region32: #{tpu_custom_call.1} parent=19 // pred_fallthru
          _
      $region20: #{tpu_custom_call.1} parent=5 // pred_fallthru
        _
      %p208 = scmp.le.s32.totalorder 1, %s13
      %p209 = scmp.lt.s32.totalorder %s13, 5
      %p210 = pnand %p208, %p209
      %p211 = pneg %p210
      // Predicated region
      $region33: #{tpu_custom_call.1} parent=5 // pred_check
        _
      $region34: #{tpu_custom_call.1} parent=5 // pred_check_branch
        %213 = sbr.rel (%p210) target = $region36
      $region35: #{tpu_custom_call.1} parent=5 // pred_region
        %s214 = ssub.s32 %s13, 1
        %p215 = scmp.lt.s32.totalorder %s23, 1
        %s216 = scalar_select %p215, %s23, 1
        %p217 = scmp.lt.s32.totalorder %s22, 1
        %s218 = scalar_select %p217, %s22, 1
        %s219 = smul.addr %s218, 2
        %s220 = smul.addr %s216, 4
        %s221 = sadd.s32 %s219, %s220
        %s222 = smul.addr %s221, 8
        %s223 = scalar_lea.vmem %s0, %s222
        %p224 = pneg %p53
        %p225 = pneg %p50
        %p226 = scmp.lt.s32.totalorder %s23, 1
        %s227 = scalar_select %p226, %s23, 1
        %p228 = scmp.lt.s32.totalorder %s22, 1
        %s229 = scalar_select %p228, %s22, 1
        %s230 = smul.addr %s227, 2
        %s231 = sadd.s32 %s229, %s230
        %s232 = smul.addr %s231, 8
        %s233 = scalar_lea.vmem %s1, %s232
        %p234 = pneg %p81
        %p235 = pneg %p78
        %p236 = pneg %p102
        %p237 = pneg %p99
        %p238 = scmp.lt.s32.totalorder %s22, 1
        %s239 = scalar_select %p238, %s22, 1
        %s240 = smul.addr %s239, 8
        %s241 = scalar_lea.vmem %s3, %s240
        %p242 = pneg %p128
        %p243 = pneg %p125
        %p244 = pneg %p156
        %p245 = pneg %p153
        %s246 = sand.u32 %s143, 1
        %s247 = scalar_lea.sflag [#allocation3], %s246
        %s248 = sand.u32 %s143, 1
        %s249 = smul.addr %s248, 8
        %s250 = scalar_lea.vmem [#allocation2], %s249
        %p251 = scmp.lt.s32.totalorder %s23, 1
        %s252 = scalar_select %p251, %s23, 1
        %p253 = scmp.lt.s32.totalorder %s22, 1
        %s254 = scalar_select %p253, %s22, 1
        %s255 = smul.addr %s254, 2
        %s256 = smul.addr %s252, 4
        %s257 = sadd.s32 %s255, %s256
        %s258 = smul.addr %s257, 8
        %s259 = scalar_lea.vmem %s0, %s258
        %p260 = scmp.lt.s32.totalorder %s23, 1
        %s261 = scalar_select %p260, %s23, 1
        %p262 = scmp.lt.s32.totalorder %s22, 1
        %s263 = scalar_select %p262, %s22, 1
        %s264 = smul.addr %s261, 2
        %s265 = sadd.s32 %s263, %s264
        %s266 = smul.addr %s265, 8
        %s267 = scalar_lea.vmem %s1, %s266
        %p268 = scmp.lt.s32.totalorder %s22, 1
        %s269 = scalar_select %p268, %s22, 1
        %s270 = smul.addr %s269, 8
        %s271 = scalar_lea.vmem %s3, %s270
        %v272 = vld [vmem:[%s259] sm:$0xff]
        %v273 = vld [vmem:[%s259 + $0x8] sm:$0x3]
        %v274 = vld [vmem:[%s267] sm:$0xff]
        %v275 = vlaneseq
        %v276 = vand.u32 %v275, 127
        %277 = vset.pattern.permute.xlu0 0
        %278 = vperm.xlu0 %277, %v274
        %v279 = vpop.permute.xlu0 %278
        %vm280 = vcmp.eq.s32.totalorder %v276, %v279
        %281 = vset.pattern.permute.xlu0 1
        %282 = vperm.xlu0 %281, %v274
        %v283 = vpop.permute.xlu0 %282
        %vm284 = vcmp.eq.s32.totalorder %v276, %v283
        %vm285 = vmor %vm280, %vm284
        %286 = vset.pattern.permute.xlu0 2
        %287 = vperm.xlu0 %286, %v274
        %v288 = vpop.permute.xlu0 %287
        %vm289 = vcmp.eq.s32.totalorder %v276, %v288
        %vm290 = vmor %vm285, %vm289
        %291 = vset.pattern.permute.xlu0 3
        %292 = vperm.xlu0 %291, %v274
        %v293 = vpop.permute.xlu0 %292
        %vm294 = vcmp.eq.s32.totalorder %v276, %v293
        %vm295 = vmor %vm290, %vm294
        %v296 = vsel %vm295, 1, 0
        %v297 = vcvt.s32.f32 %v296
        %vm300 = vcmask 1046528
        %v301 = vrot.slane %v272, 1
        %v302 = vrot.slane %v273, 1
        %v303 = vsel %vm300, %v301, %v302
        %304 = vrot.lane.b32.xlu0 %v303, 4
        %v305 = vpop.permute.xlu0 %304
        %vm307 = vcmask 1045504
        %v308 = vrot.slane %v272, 2
        %v309 = vrot.slane %v273, 2
        %v310 = vsel %vm307, %v308, %v309
        %311 = vrot.lane.b32.xlu0 %v310, 8
        %v312 = vpop.permute.xlu0 %311
        %315 = vrot.lane.b32.xlu0 %v297, 12
        %v316 = vpop.permute.xlu0 %315
        %vm318 = vcmask 31744
        %v319 = vsel %vm318, %v272, %v305
        %vm320 = vcmask 64512
        %v321 = vsel %vm320, %v319, %v312
        %vm322 = vcmask 97280
        %v323 = vsel %vm322, %v321, %v316
        %v324 = vld [vmem:[%s2] sm:$0xff]
        %v325 = vld [vmem:[%s2 + $0x8] sm:$0xff]
        %v326 = vld [vmem:[%s2 + $0x10] sm:$0xff]
        %v327 = vld [vmem:[%s2 + $0x18] sm:$0xff]
        %v328 = vld [vmem:[%s2 + $0x20] sm:$0xff]
        %v329 = vld [vmem:[%s2 + $0x28] sm:$0xff]
        %v330 = vld [vmem:[%s2 + $0x30] sm:$0xff]
        %v331 = vld [vmem:[%s2 + $0x38] sm:$0xff]
        %v332 = vld [vmem:[%s2 + $0x40] sm:$0xff]
        %v333 = vld [vmem:[%s2 + $0x48] sm:$0xff]
        %v334 = vld [vmem:[%s2 + $0x50] sm:$0xff]
        %v335 = vld [vmem:[%s271] sm:$0xff]
        %vm336 = vcmask 719872
        %v338 = vsel %vm336, %v323, 0
        %340 = vmatpush.msra.mxu0 0.0
        %341 = vmatpush.msra.mxu0 0.0
        %342 = vmatpush.msra.mxu0 0.0
        %343 = vmatpush.msra.mxu0 0.0
        %344 = vmatpush.msra.mxu0 0.0
        %345 = vmatpush.msra.mxu0 %v334
        %346 = vmatpush.msra.mxu0 %v333
        %347 = vmatpush.msra.mxu0 %v332
        %348 = vmatpush.msra.mxu0 %v331
        %349 = vmatpush.msra.mxu0 %v330
        %350 = vmatpush.msra.mxu0 %v329
        %351 = vmatpush.msra.mxu0 %v328
        %352 = vmatpush.msra.mxu0 %v327
        %353 = vmatpush.msra.mxu0 %v326
        %354 = vmatpush.msra.mxu0 %v325
        %355 = vmatpush.msra.mxu0 %v324
        %356 = vmatmul.f32.gmra.mxu0 %v338
        %v357 = vpop.f32.mrf.mxu0
        %v358 = vadd.f32 %v335, %v357
        %359 = vdwg.mxu0
        %360 = vst [vmem:[%s250] sm:$0xff] %v358
        %s361 = sand.u32 %s143, 1
        %s362 = scalar_lea.sflag [#allocation3], %s361
        %s363 = sand.u32 %s143, 1
        %s364 = smul.addr %s363, 8
        %s365 = scalar_lea.vmem [#allocation2], %s364
        // Predicated region
        $region37: #{tpu_custom_call.1} parent=35 // pred_check
          %p366 = pneg %p153
        $region38: #{tpu_custom_call.1} parent=35 // pred_check_branch
          %368 = sbr.rel (%p366) target = $region40
        $region39: #{tpu_custom_call.1} parent=35 // pred_region
          %370 = vsyncadd %s362, 0
          %s371 = smul.addr %s23, 2
          %s372 = sadd.s32 %s22, %s371
          %s373 = smul.addr %s372, 8
          %s374 = scalar_lea.hbm %s4, %s373
          %s376 = sshll.u32 %s365, 4
          %s377 = int_to_ptr.vmem [resolvable:$true] %s376
          %s378 = sshll.u32 %s374, 4
          %s379 = int_to_ptr.hbm [resolvable:$true] %s378
          %381 = dma.vmem_to_hbm [thread:$0]  %s377, 128, %s379, %s362
        $region40: #{tpu_custom_call.1} parent=35 // pred_fallthru
          _
      $region36: #{tpu_custom_call.1} parent=5 // pred_fallthru
        _
      %p382 = scmp.le.s32.totalorder 2, %s13
      // Predicated region
      $region41: #{tpu_custom_call.1} parent=5 // pred_check
        %p383 = pneg %p382
      $region42: #{tpu_custom_call.1} parent=5 // pred_check_branch
        %385 = sbr.rel (%p383) target = $region44
      $region43: #{tpu_custom_call.1} parent=5 // pred_region
        %s386 = ssub.s32 %s13, 2
        // Predicated region
        $region45: #{tpu_custom_call.1} parent=43 // pred_check
          %p387 = pneg %p159
        $region46: #{tpu_custom_call.1} parent=43 // pred_check_branch
          %389 = sbr.rel (%p387) target = $region48
        $region47: #{tpu_custom_call.1} parent=43 // pred_region
          %s390 = sand.u32 %s144, 1
          %s391 = scalar_lea.sflag [#allocation3], %s390
          %s392 = sand.u32 %s144, 1
          %s393 = smul.addr %s392, 8
          %s394 = scalar_lea.vmem [#allocation2], %s393
          %396 = dma.done %s391, 128
        $region48: #{tpu_custom_call.1} parent=43 // pred_fallthru
          _
      $region44: #{tpu_custom_call.1} parent=5 // pred_fallthru
        _
    $region6: #{tpu_custom_call.1} parent=1 // loop_footer
      %s17 = sadd.s32 1, %s13
    $region7: #{tpu_custom_call.1} parent=1 // loop_footer_branch
      %12 = sbr.rel target = $region3
    $region8: #{tpu_custom_call.1} parent=1 // loop_exit
      _
    %397 = vsyncpa [#allocation3], 1
    %s398 = scalar_lea.sflag [#allocation3], 1
    %399 = vsyncpa %s398, 1

</llo_original>
